<compile_context>
chip_gen: v6e
topology: v6e:2x2x1
jax: 0.10.0
libtpu: 0.0.40
codegen_flags: <defaults>
</compile_context>

<pallas_src>
import math
from functools import partial

import jax
import jax.numpy as jnp
from jax.experimental import pallas as pl
from jax.experimental.pallas import tpu as pltpu


def _odd(i):
    i = int(i)
    return i + 1 if i % 2 == 0 else i


# ---------------------------------------------------------------------------
# Kernel 1 (tiny, one-shot): gate = sigmoid( Conv1d( SiLU( Linear(cls) ) ) )
# Cost here is irrelevant (runs once on a (B, C) vector), so the small matmul
# and the pad/slice conv stay simple.  It is OFF the memory-bound hot path.
# ---------------------------------------------------------------------------
def _gate_kernel(convw_ref, cls_ref, w_ref, b_ref, gate_ref, *, C, K):
    # convw_ref : (K,)      SMEM   conv kernel weights (scalars)
    # cls_ref   : (B, Dcls) VMEM
    # w_ref     : (Dcls, C) VMEM   linear weight (in->out layout)
    # b_ref     : (1, C)    VMEM   linear bias
    # gate_ref  : (B, C)    VMEM   f32 output gate
    y = jnp.dot(cls_ref[...], w_ref[...], preferred_element_type=jnp.float32)
    y = y + b_ref[...].astype(jnp.float32)          # (B, C)

    s = y * jax.nn.sigmoid(y)                       # SiLU

    # Conv1d: cross-correlation, zero padding K//2, no bias (K is tiny & static).
    pad = K // 2
    if pad > 0:
        zeros = jnp.zeros((s.shape[0], pad), dtype=s.dtype)
        padded = jnp.concatenate([zeros, s, zeros], axis=1)   # (B, C + 2*pad)
    else:
        padded = s
    conv = jnp.zeros_like(s)
    for j in range(K):
        conv = conv + convw_ref[j] * padded[:, j:j + C]

    gate_ref[...] = jax.nn.sigmoid(conv)            # (B, C) f32


# ---------------------------------------------------------------------------
# Kernel 2 (hot loop, mem-bound): out = X * gate, channel-wise, NCHW layout.
# ---------------------------------------------------------------------------
def _gating_kernel(gate_ref, x_ref, o_ref):
    # gate_ref : (1, C, 1)  f32
    # x_ref    : (1, C, T)  X tile (spatial on lanes)
    # o_ref    : (1, C, T)
    o_ref[...] = (x_ref[...] * gate_ref[...]).astype(o_ref.dtype)


def _choose_hw_tile(hw, c, itemsize, target_bytes=2 << 20):
    """Largest multiple of 128 that divides hw with c*T*itemsize <= target_bytes."""
    if hw % 128 != 0:
        return hw  # full extent: block dim equal to full array dim is always legal
    cap = max(128, (target_bytes // max(c * itemsize, 1)) // 128 * 128)
    best = 128
    t = 128
    while t <= hw and t <= cap:
        if hw % t == 0:
            best = t
        t += 128
    return best


def efficient_conditioning_attention_block(x_nchw, cls, lin_w, lin_b, conv_w):
    """x_nchw: (B, C, H, W); cls: (B, Dcls); lin_w: (Dcls, C); lin_b: (C,); conv_w: (K,)."""
    B, C, H, W = x_nchw.shape
    Dcls = cls.shape[1]
    K = conv_w.shape[0]
    HW = H * W

    # ---- (1) one-shot gate computation: (B, C) f32 ----
    gate = pl.pallas_call(
        partial(_gate_kernel, C=C, K=K),
        out_shape=jax.ShapeDtypeStruct((B, C), jnp.float32),
        grid_spec=pltpu.PrefetchScalarGridSpec(
            num_scalar_prefetch=0,
            grid=(1,),
            in_specs=[
                pl.BlockSpec(memory_space=pltpu.MemorySpace.SMEM),  # conv weights
                pl.BlockSpec((B, Dcls), lambda i: (0, 0)),          # cls
                pl.BlockSpec((Dcls, C), lambda i: (0, 0)),          # linear weight
                pl.BlockSpec((1, C), lambda i: (0, 0)),             # linear bias
            ],
            out_specs=pl.BlockSpec((B, C), lambda i: (0, 0)),
        ),
    )(conv_w, cls, lin_w, lin_b.reshape(1, C))

    # ---- (2) mem-bound channel gating, directly on NCHW (no transposes) ----
    x_flat = x_nchw.reshape(B, C, HW)     # free: row-major contiguous reshape
    gate3 = gate.reshape(B, C, 1)         # free: metadata-only reshape

    T = _choose_hw_tile(HW, C, x_nchw.dtype.itemsize)
    grid = (B, HW // T)

    out = pl.pallas_call(
        _gating_kernel,
        out_shape=jax.ShapeDtypeStruct((B, C, HW), x_nchw.dtype),
        grid_spec=pltpu.PrefetchScalarGridSpec(
            num_scalar_prefetch=0,
            grid=grid,
            in_specs=[
                pl.BlockSpec((1, C, 1), lambda b, t: (b, 0, 0)),    # gate (tiny)
                pl.BlockSpec((1, C, T), lambda b, t: (b, 0, t)),    # X tile
            ],
            out_specs=pl.BlockSpec((1, C, T), lambda b, t: (b, 0, t)),
        ),
        compiler_params=pltpu.CompilerParams(
            dimension_semantics=("parallel", "parallel"),
        ),
        # NOTE: if the caller does not need X afterwards, this could gate in
        # place via input_output_aliases={1: 0}; kept out-of-place here since
        # the demo reuses X for the reference check.
    )(gate3, x_flat)

    return out.reshape(B, C, H, W)


def _reference(x_nchw, cls, lin_w, lin_b, conv_w):
    """Pure-JAX reference mirroring the PyTorch forward."""
    C = x_nchw.shape[1]
    K = conv_w.shape[0]
    y = cls @ lin_w + lin_b                        # (B, C)
    s = y * jax.nn.sigmoid(y)                      # SiLU
    pad = K // 2
    sp = jnp.pad(s, ((0, 0), (pad, pad)))
    conv = sum(conv_w[j] * sp[:, j:j + C] for j in range(K))
    gate = jax.nn.sigmoid(conv)                    # (B, C)
    return x_nchw * gate[:, :, None, None]


if __name__ == "__main__":
    # Small shapes: class_dimension=8, input_channels=16 -> conv kernel size 3.
    B, C, H, W = 2, 16, 16, 16
    Dcls = 8
    gamma, b_param = 2.0, 1.0
    K = _odd(math.log2(C) / gamma + b_param / gamma)   # = 3

    key = jax.random.PRNGKey(0)
    kx, kc, kw, kb, kcw = jax.random.split(key, 5)

    x = jax.random.normal(kx, (B, C, H, W), dtype=jnp.float32)
    cls = jax.random.normal(kc, (B, Dcls), dtype=jnp.float32)

    # Deterministic parameter init (PyTorch-like uniform ranges, synthetic values).
    lin_bound = 1.0 / math.sqrt(Dcls)
    lin_w = jax.random.uniform(kw, (Dcls, C), jnp.float32, -lin_bound, lin_bound)
    lin_b = jax.random.uniform(kb, (C,), jnp.float32, -lin_bound, lin_bound)
    conv_bound = 1.0 / math.sqrt(K)
    conv_w = jax.random.uniform(kcw, (K,), jnp.float32, -conv_bound, conv_bound)

    out = efficient_conditioning_attention_block(x, cls, lin_w, lin_b, conv_w)
    out = jax.block_until_ready(out)

    ref = _reference(x, cls, lin_w, lin_b, conv_w)
    assert out.shape == (B, C, H, W)
    assert jnp.allclose(out, ref, atol=1e-5, rtol=1e-5), "mismatch vs reference"

    print("KERNEL_OK")
</pallas_src>

<mosaic_0001>
module attributes {stable_mosaic.version = 11 : i64} {
  func.func @_gate_kernel(%arg0: i32, %arg1: memref<3xf32, #tpu.memory_space<smem>>, %arg2: memref<2x8xf32, #tpu.memory_space<vmem>>, %arg3: memref<8x16xf32, #tpu.memory_space<vmem>>, %arg4: memref<1x16xf32, #tpu.memory_space<vmem>>, %arg5: memref<2x16xf32, #tpu.memory_space<vmem>>) attributes {dimension_semantics = [#tpu.dimension_semantics<arbitrary>], iteration_bounds = array<i64: 1>, scalar_prefetch = 0 : i64, scratch_operands = 0 : i64, tpu.core_type = #tpu.core_type<tc>, window_params = [{transform_indices = @transform_0, window_bounds = array<i64: 3>}, {pipeline_mode = #tpu.pipeline_mode<synchronous>, transform_indices = @transform_1, window_bounds = array<i64: 2, 8>}, {pipeline_mode = #tpu.pipeline_mode<synchronous>, transform_indices = @transform_2, window_bounds = array<i64: 8, 16>}, {pipeline_mode = #tpu.pipeline_mode<synchronous>, transform_indices = @transform_3, window_bounds = array<i64: 1, 16>}, {pipeline_mode = #tpu.pipeline_mode<synchronous>, transform_indices = @transform_4, window_bounds = array<i64: 2, 16>}]} {
    %c0 = arith.constant 0 : index
    %c0_0 = arith.constant 0 : index
    %0 = vector.load %arg2[%c0, %c0_0] : memref<2x8xf32, #tpu.memory_space<vmem>>, vector<2x8xf32>
    %c0_1 = arith.constant 0 : index
    %c0_2 = arith.constant 0 : index
    %1 = vector.load %arg3[%c0_1, %c0_2] : memref<8x16xf32, #tpu.memory_space<vmem>>, vector<8x16xf32>
    %cst = arith.constant dense<0.000000e+00> : vector<2x16xf32>
    %2 = tpu.matmul %0, %1, %cst {dimension_numbers = #tpu.dot_dimension_numbers<[1], [0], [0], [1], [0, 0, 1, 1], [], []>} : vector<2x8xf32>, vector<8x16xf32>, vector<2x16xf32> -> vector<2x16xf32>
    %c0_3 = arith.constant 0 : index
    %c0_4 = arith.constant 0 : index
    %3 = vector.load %arg4[%c0_3, %c0_4] : memref<1x16xf32, #tpu.memory_space<vmem>>, vector<1x16xf32>
    %4 = vector.broadcast %3 : vector<1x16xf32> to vector<2x16xf32>
    %5 = arith.addf %2, %4 : vector<2x16xf32>
    %6 = arith.negf %5 : vector<2x16xf32>
    %7 = math.exp %6 : vector<2x16xf32>
    %cst_5 = arith.constant 1.000000e+00 : f32
    %8 = vector.broadcast %cst_5 : f32 to vector<2x16xf32>
    %9 = arith.addf %8, %7 : vector<2x16xf32>
    %10 = arith.divf %8, %9 : vector<2x16xf32>
    %11 = arith.mulf %5, %10 : vector<2x16xf32>
    %cst_6 = arith.constant 0.000000e+00 : f32
    %12 = vector.broadcast %cst_6 : f32 to vector<2x1xf32>
    %13 = tpu.concatenate %12, %11, %12 in 1 : vector<2x1xf32>, vector<2x16xf32>, vector<2x1xf32> -> vector<2x18xf32>
    %cst_7 = arith.constant 0.000000e+00 : f32
    %14 = vector.broadcast %cst_7 : f32 to vector<2x16xf32>
    %c0_8 = arith.constant 0 : index
    %15 = memref.load %arg1[%c0_8] : memref<3xf32, #tpu.memory_space<smem>>
    %16 = vector.extract_strided_slice %13 {offsets = [0, 0], sizes = [2, 16], strides = [1, 1]} : vector<2x18xf32> to vector<2x16xf32>
    %17 = vector.broadcast %15 : f32 to vector<2x16xf32>
    %18 = arith.mulf %17, %16 : vector<2x16xf32>
    %19 = arith.addf %14, %18 : vector<2x16xf32>
    %c1 = arith.constant 1 : index
    %20 = memref.load %arg1[%c1] : memref<3xf32, #tpu.memory_space<smem>>
    %21 = vector.extract_strided_slice %13 {offsets = [0, 1], sizes = [2, 16], strides = [1, 1]} : vector<2x18xf32> to vector<2x16xf32>
    %22 = vector.broadcast %20 : f32 to vector<2x16xf32>
    %23 = arith.mulf %22, %21 : vector<2x16xf32>
    %24 = arith.addf %19, %23 : vector<2x16xf32>
    %c2 = arith.constant 2 : index
    %25 = memref.load %arg1[%c2] : memref<3xf32, #tpu.memory_space<smem>>
    %26 = vector.extract_strided_slice %13 {offsets = [0, 2], sizes = [2, 16], strides = [1, 1]} : vector<2x18xf32> to vector<2x16xf32>
    %27 = vector.broadcast %25 : f32 to vector<2x16xf32>
    %28 = arith.mulf %27, %26 : vector<2x16xf32>
    %29 = arith.addf %24, %28 : vector<2x16xf32>
    %30 = arith.negf %29 : vector<2x16xf32>
    %31 = math.exp %30 : vector<2x16xf32>
    %cst_9 = arith.constant 1.000000e+00 : f32
    %32 = vector.broadcast %cst_9 : f32 to vector<2x16xf32>
    %33 = arith.addf %32, %31 : vector<2x16xf32>
    %34 = arith.divf %32, %33 : vector<2x16xf32>
    %c0_10 = arith.constant 0 : index
    %c0_11 = arith.constant 0 : index
    %35 = vector.load %arg5[%c0_10, %c0_11] : memref<2x16xf32, #tpu.memory_space<vmem>>, vector<2x16xf32>
    tpu.vector_store %arg5[%c0_10, %c0_11], %34 {strides = array<i32>} : memref<2x16xf32, #tpu.memory_space<vmem>>, vector<2x16xf32>,
    return
  }
  func.func @transform_0(%arg0: i32) -> i32 {
    %c0_i32 = arith.constant 0 : i32
    %c0_i32_0 = arith.constant 0 : i32
    return %c0_i32 : i32
  }
  func.func @transform_1(%arg0: i32) -> (i32, i32) {
    %c0_i32 = arith.constant 0 : i32
    %c0_i32_0 = arith.constant 0 : i32
    %c0_i32_1 = arith.constant 0 : i32
    return %c0_i32, %c0_i32_0 : i32, i32
  }
  func.func @transform_2(%arg0: i32) -> (i32, i32) {
    %c0_i32 = arith.constant 0 : i32
    %c0_i32_0 = arith.constant 0 : i32
    %c0_i32_1 = arith.constant 0 : i32
    return %c0_i32, %c0_i32_0 : i32, i32
  }
  func.func @transform_3(%arg0: i32) -> (i32, i32) {
    %c0_i32 = arith.constant 0 : i32
    %c0_i32_0 = arith.constant 0 : i32
    %c0_i32_1 = arith.constant 0 : i32
    return %c0_i32, %c0_i32_0 : i32, i32
  }
  func.func @transform_4(%arg0: i32) -> (i32, i32) {
    %c0_i32 = arith.constant 0 : i32
    %c0_i32_0 = arith.constant 0 : i32
    %c0_i32_1 = arith.constant 0 : i32
    return %c0_i32, %c0_i32_0 : i32, i32
  }
}

</mosaic_0001>

<llo_original>
// kernel: tpu_custom_call.1
$region0: #{tpu_custom_call.1}
  #allocation0 [shape = 'u32[]', space=smem, size = 0x4, offset = 0x4, fixed_abs, tag = 'smem constant byte address 0x4 - core index']
  #allocation1 [shape = 'u32[144,128]{1,0:T(1,128)}', space=vmem, size = 0x12000, scoped, tag = 'internal scratch']
  %s0 = inlined_call_operand.hbm [shape: f32[3], index: 0, kind: input, shape index: {}]
  %s1 = inlined_call_operand.hbm [shape: f32[2,8], index: 1, kind: input, shape index: {}]
  %s2 = inlined_call_operand.hbm [shape: f32[8,16], index: 2, kind: input, shape index: {}]
  %s3 = inlined_call_operand.vmem [shape: f32[1,16], index: 3, kind: input, shape index: {}]
  %s4 = inlined_call_operand.hbm [shape: f32[2,16], index: 4, kind: output, shape index: {}]
  %s5 = sld [smem:[#allocation0]]
  $region38: #{tpu_custom_call.1} parent=0
    _
  %s7 = ssub.s32 1, %s5
  %s8 = scalar_select 0, %s7, %s5
  $region1: #{tpu_custom_call.1} parent=0
    #allocation2 [shape = 'u8[512]{0}', space=smem, size = 0x200, scoped, tag = 'input window, operand 0, single buffered']
    #allocation3 [shape = 's32[1]{0}', space=sflag, size = 0x4, scoped, tag = 'scoped memory for tpu_custom_call.1']
    #allocation4 [shape = 's32[1]{0}', space=sflag, size = 0x4, scoped, tag = 'scoped memory for tpu_custom_call.1']
    #allocation5 [shape = 's32[1]{0}', space=sflag, size = 0x4, scoped, tag = 'scoped memory for tpu_custom_call.1']
    #allocation6 [shape = 'u8[1024]{0}', space=vmem, size = 0x400, scoped, tag = 'input window, operand 1, single buffered']
    #allocation7 [shape = 'u8[4096]{0}', space=vmem, size = 0x1000, scoped, tag = 'input window, operand 2, single buffered']
    #allocation8 [shape = 's32[1]{0}', space=sflag, size = 0x4, scoped, tag = 'scoped memory for tpu_custom_call.1']
    #allocation9 [shape = 'u8[1024]{0}', space=vmem, size = 0x400, scoped, tag = 'output window, operand 0, single buffered']
    %9 = vsyncpa [#allocation5], 0
    %10 = vsyncpa [#allocation3], 0
    %11 = vsyncpa [#allocation8], 0
    %12 = vsyncpa [#allocation4], 0
    // Predicated region
    $region2: #{tpu_custom_call.1} parent=1 // pred_check
      _
    $region3: #{tpu_custom_call.1} parent=1 // pred_check_branch
      %14 = sbr.rel (0) target = $region5
    $region4: #{tpu_custom_call.1} parent=1 // pred_region
      %s16 = ssub.s32 16, 16
      %17 = vsyncadd [#allocation5], %s16
      %20 = dma.hbm_to_smem %s0, 16, [#allocation2], [#allocation5]
    $region5: #{tpu_custom_call.1} parent=1 // pred_fallthru
      _
    // Predicated region
    $region6: #{tpu_custom_call.1} parent=1 // pred_check
      _
    $region7: #{tpu_custom_call.1} parent=1 // pred_check_branch
      %22 = sbr.rel (0) target = $region9
    $region8: #{tpu_custom_call.1} parent=1 // pred_region
      %s24 = ssub.s32 32, 32
      %25 = vsyncadd [#allocation3], %s24
      %s27 = sshll.u32 [#allocation6], 4
      %s28 = int_to_ptr.vmem [resolvable:$true] %s27
      %30 = dma.hbm_to_vmem [thread:$0]  %s1, 32, %s28, [#allocation3]
    $region9: #{tpu_custom_call.1} parent=1 // pred_fallthru
      _
    // Predicated region
    $region10: #{tpu_custom_call.1} parent=1 // pred_check
      _
    $region11: #{tpu_custom_call.1} parent=1 // pred_check_branch
      %32 = sbr.rel (0) target = $region13
    $region12: #{tpu_custom_call.1} parent=1 // pred_region
      %s34 = ssub.s32 128, 128
      %35 = vsyncadd [#allocation8], %s34
      %s37 = sshll.u32 [#allocation7], 4
      %s38 = int_to_ptr.vmem [resolvable:$true] %s37
      %40 = dma.hbm_to_vmem [thread:$0]  %s2, 128, %s38, [#allocation8]
    $region13: #{tpu_custom_call.1} parent=1 // pred_fallthru
      _
    // Predicated region
    $region14: #{tpu_custom_call.1} parent=1 // pred_check
      _
    $region15: #{tpu_custom_call.1} parent=1 // pred_check_branch
      %42 = sbr.rel (0) target = $region17
    $region16: #{tpu_custom_call.1} parent=1 // pred_region
      _
    $region17: #{tpu_custom_call.1} parent=1 // pred_fallthru
      _
    // Predicated region
    $region18: #{tpu_custom_call.1} parent=1 // pred_check
      _
    $region19: #{tpu_custom_call.1} parent=1 // pred_check_branch
      %44 = sbr.rel (0) target = $region21
    $region20: #{tpu_custom_call.1} parent=1 // pred_region
      %45 = dma.done [#allocation5], 16
    $region21: #{tpu_custom_call.1} parent=1 // pred_fallthru
      _
    // Predicated region
    $region22: #{tpu_custom_call.1} parent=1 // pred_check
      _
    $region23: #{tpu_custom_call.1} parent=1 // pred_check_branch
      %47 = sbr.rel (0) target = $region25
    $region24: #{tpu_custom_call.1} parent=1 // pred_region
      %48 = dma.done [#allocation3], 32
    $region25: #{tpu_custom_call.1} parent=1 // pred_fallthru
      _
    // Predicated region
    $region26: #{tpu_custom_call.1} parent=1 // pred_check
      _
    $region27: #{tpu_custom_call.1} parent=1 // pred_check_branch
      %50 = sbr.rel (0) target = $region29
    $region28: #{tpu_custom_call.1} parent=1 // pred_region
      %51 = dma.done [#allocation8], 128
    $region29: #{tpu_custom_call.1} parent=1 // pred_fallthru
      _
    %52 = sfence
    %v53 = vld [vmem:[#allocation6] sm:$0x3]
    %v54 = vld [vmem:[#allocation7] sm:$0xff]
    %v55 = vld [vmem:[%s3] sm:$0x1]
    %v57 = vlaneseq
    %v58 = vshrl.u32 %v57, 7
    %v59 = vsub.s32 0, %v58
    %v60 = vrot.slane %v55, %v59
    %vm62 = vcmask 64512
    %v64 = vsel %vm62, %v53, 0
    %66 = vmatprep.subr.mxu0 0.0
    %67 = vmatpush1.msra.mxu0 0.0
    %68 = vmatprep.subr.mxu0 0.0
    %69 = vmatpush1.msra.mxu0 0.0
    %70 = vmatprep.subr.mxu0 0.0
    %71 = vmatpush1.msra.mxu0 0.0
    %72 = vmatprep.subr.mxu0 0.0
    %73 = vmatpush1.msra.mxu0 0.0
    %74 = vmatprep.subr.mxu0 0.0
    %75 = vmatpush1.msra.mxu0 0.0
    %76 = vmatprep.subr.mxu0 0.0
    %77 = vmatpush1.msra.mxu0 0.0
    %78 = vmatprep.subr.mxu0 0.0
    %79 = vmatpush1.msra.mxu0 0.0
    %80 = vmatprep.subr.mxu0 0.0
    %81 = vmatpush1.msra.mxu0 0.0
    %82 = vmatprep.subr.mxu0 0.0
    %83 = vmatpush1.msra.mxu0 0.0
    %84 = vmatprep.subr.mxu0 0.0
    %85 = vmatpush1.msra.mxu0 0.0
    %86 = vmatprep.subr.mxu0 0.0
    %87 = vmatpush1.msra.mxu0 0.0
    %88 = vmatprep.subr.mxu0 0.0
    %89 = vmatpush1.msra.mxu0 0.0
    %90 = vmatprep.subr.mxu0 0.0
    %91 = vmatpush1.msra.mxu0 0.0
    %92 = vmatprep.subr.mxu0 0.0
    %93 = vmatpush1.msra.mxu0 0.0
    %94 = vmatprep.subr.mxu0 0.0
    %95 = vmatpush1.msra.mxu0 0.0
    %96 = vmatprep.subr.mxu0 0.0
    %97 = vmatpush1.msra.mxu0 %v54
    %98 = vmatprep.subr.mxu0 0.0
    %99 = vmatpush2.msra.mxu0 0.0
    %100 = vmatprep.subr.mxu0 0.0
    %101 = vmatpush2.msra.mxu0 0.0
    %102 = vmatprep.subr.mxu0 0.0
    %103 = vmatpush2.msra.mxu0 0.0
    %104 = vmatprep.subr.mxu0 0.0
    %105 = vmatpush2.msra.mxu0 0.0
    %106 = vmatprep.subr.mxu0 0.0
    %107 = vmatpush2.msra.mxu0 0.0
    %108 = vmatprep.subr.mxu0 0.0
    %109 = vmatpush2.msra.mxu0 0.0
    %110 = vmatprep.subr.mxu0 0.0
    %111 = vmatpush2.msra.mxu0 0.0
    %112 = vmatprep.subr.mxu0 0.0
    %113 = vmatpush2.msra.mxu0 0.0
    %114 = vmatprep.subr.mxu0 0.0
    %115 = vmatpush2.msra.mxu0 0.0
    %116 = vmatprep.subr.mxu0 0.0
    %117 = vmatpush2.msra.mxu0 0.0
    %118 = vmatprep.subr.mxu0 0.0
    %119 = vmatpush2.msra.mxu0 0.0
    %120 = vmatprep.subr.mxu0 0.0
    %121 = vmatpush2.msra.mxu0 0.0
    %122 = vmatprep.subr.mxu0 0.0
    %123 = vmatpush2.msra.mxu0 0.0
    %124 = vmatprep.subr.mxu0 0.0
    %125 = vmatpush2.msra.mxu0 0.0
    %126 = vmatprep.subr.mxu0 0.0
    %127 = vmatpush2.msra.mxu0 0.0
    %128 = vmatprep.subr.mxu0 0.0
    %129 = vmatpush2.msra.mxu0 0.0
    %130 = vmatprep.mubr.f32.mxu0 0.0
    %131 = vmatmul.mubr.f32.gmra.mxu0 %v64
    %v132 = vpop.f32.mrf.mxu0
    %v133 = vadd.f32 %v60, %v132
    %v134 = vpop.f32.mrf.mxu0
    %135 = vdwg.mxu0
    %v136 = vxor.u32 %v133, 2147483648
    %v137 = vmul.f32 %v136, 1.442695
    %v138 = vpow.pop %v137
    %v139 = vadd.f32 %v138, 1.0
    %v140 = vrcp.pop %v139
    %v141 = vmul.f32 1.0, %v140
    %v142 = vmul.f32 %v133, %v141
    %144 = vrot.lane.b32.xlu0 %v142, 1
    %v145 = vpop.permute.xlu0 %144
    %vm147 = vcmask 7168
    %v148 = vsel %vm147, 0.0, %v145
    %vm149 = vcmask 138240
    %v150 = vsel %vm149, %v148, 0.0
    %s151 = sld [smem:[#allocation2]]
    %v152 = vstv %s151
    %v153 = vmul.f32 %v152, %v150
    %v154 = vadd.f32 %v153, 0.0
    %s155 = sld [smem:[#allocation2 + $0x1]]
    %v156 = vstv %s155
    %v157 = vmul.f32 %v156, %v150
    %159 = vrot.lane.b32.xlu0 %v157, 127
    %v160 = vpop.permute.xlu0 %159
    %v162 = vadd.f32 %v154, %v160
    %s163 = sld [smem:[#allocation2 + $0x2]]
    %v164 = vstv %s163
    %v165 = vmul.f32 %v164, %v150
    %167 = vrot.lane.b32.xlu0 %v165, 126
    %v168 = vpop.permute.xlu0 %167
    %v170 = vadd.f32 %v162, %v168
    %v171 = vxor.u32 %v170, 2147483648
    %v172 = vmul.f32 %v171, 1.442695
    %v173 = vpow.pop %v172
    %v174 = vadd.f32 %v173, 1.0
    %v175 = vrcp.pop %v174
    %v176 = vmul.f32 1.0, %v175
    %vm177 = vcmask 123904
    %178 = vst.msk [vmem:[#allocation9] sm:$0x3] %vm177, %v176
    // Predicated region
    $region30: #{tpu_custom_call.1} parent=1 // pred_check
      _
    $region31: #{tpu_custom_call.1} parent=1 // pred_check_branch
      %180 = sbr.rel (0) target = $region33
    $region32: #{tpu_custom_call.1} parent=1 // pred_region
      %s182 = ssub.s32 32, 32
      %183 = vsyncadd [#allocation4], %s182
      %s185 = sshll.u32 [#allocation9], 4
      %s186 = int_to_ptr.vmem [resolvable:$true] %s185
      %188 = dma.vmem_to_hbm [thread:$0]  %s186, 32, %s4, [#allocation4]
    $region33: #{tpu_custom_call.1} parent=1 // pred_fallthru
      _
    // Predicated region
    $region34: #{tpu_custom_call.1} parent=1 // pred_check
      _
    $region35: #{tpu_custom_call.1} parent=1 // pred_check_branch
      %190 = sbr.rel (0) target = $region37
    $region36: #{tpu_custom_call.1} parent=1 // pred_region
      %191 = dma.done [#allocation4], 32
    $region37: #{tpu_custom_call.1} parent=1 // pred_fallthru
      _
    %192 = vsyncpa [#allocation3], 1
    %193 = vsyncpa [#allocation8], 1
    %194 = vsyncpa [#allocation4], 1
    %195 = vsyncpa [#allocation5], 1

</llo_original>
